<compile_context>
chip_gen: v5e
topology: v5e:2x2
jax: 0.10.0
libtpu: 0.0.40
codegen_flags: <defaults>
</compile_context>

<pallas_src>
import jax
import jax.numpy as jnp
from jax.experimental import pallas as pl
from jax.experimental.pallas import tpu as pltpu


def _round_up(x, m):
    return ((x + m - 1) // m) * m


def _fnn_kernel(x_ref, w1_ref, t1_ref, w2_ref, t2_ref, w3_ref, b3_ref, o_ref):
    # Layer 1: Linear (BN scale pre-folded into w1) -> +shift -> ReLU.
    # (Dropout = identity in eval mode.)  x arrives f32, cast once in-kernel.
    x = x_ref[...].astype(w1_ref.dtype)
    h1 = jnp.dot(x, w1_ref[...], preferred_element_type=jnp.float32)
    h1 = jnp.maximum(h1 + t1_ref[...], 0.0)
    # Layer 2: Linear (BN scale pre-folded into w2) -> +shift -> ReLU.
    h2 = jnp.dot(h1.astype(w2_ref.dtype), w2_ref[...],
                 preferred_element_type=jnp.float32)
    h2 = jnp.maximum(h2 + t2_ref[...], 0.0)
    # Output head: narrow (output_dim) store; masked vst is trivial next to the
    # MXU cadence, and it avoids 128x output write amplification.
    o_ref[...] = (jnp.dot(h2.astype(w3_ref.dtype), w3_ref[...],
                          preferred_element_type=jnp.float32) + b3_ref[...])


def _linear_init(key, fan_in, fan_out):
    """PyTorch nn.Linear default init: U(-1/sqrt(fan_in), 1/sqrt(fan_in))."""
    kw, kb = jax.random.split(key)
    bound = 1.0 / jnp.sqrt(jnp.float32(fan_in))
    # stored as (in, out) so the kernel computes x @ W
    w = jax.random.uniform(kw, (fan_in, fan_out), jnp.float32, -bound, bound)
    b = jax.random.uniform(kb, (fan_out,), jnp.float32, -bound, bound)
    return w, b


def _bn_fold(w, b, dim, *, gamma=None, beta=None, mean=None, var=None,
             eps=1e-5):
    """Fold eval-mode BatchNorm1d into the preceding Linear.

    w' = w * scale, shift = (b - mean) * scale + beta, scale = gamma/sqrt(var+eps).
    Defaults correspond to freshly-initialized BN (gamma=1, beta=0, mean=0,
    var=1); pass real running stats here when loading trained parameters.
    """
    gamma = jnp.ones((dim,), jnp.float32) if gamma is None else gamma
    beta = jnp.zeros((dim,), jnp.float32) if beta is None else beta
    mean = jnp.zeros((dim,), jnp.float32) if mean is None else mean
    var = jnp.ones((dim,), jnp.float32) if var is None else var
    scale = gamma / jnp.sqrt(var + eps)
    w_folded = w * scale[None, :]
    shift = (b - mean) * scale + beta
    return w_folded, shift


def make_params(input_dim, hidden_dim, output_dim, seed=0, eps=1e-5):
    k = jax.random.PRNGKey(seed)
    k1, k2, k3 = jax.random.split(k, 3)
    w1, b1 = _linear_init(k1, input_dim, hidden_dim)
    w2, b2 = _linear_init(k2, hidden_dim, hidden_dim // 2)
    w3, b3 = _linear_init(k3, hidden_dim // 2, output_dim)

    w1f, t1 = _bn_fold(w1, b1, hidden_dim, eps=eps)
    w2f, t2 = _bn_fold(w2, b2, hidden_dim // 2, eps=eps)
    return dict(w1=w1f, t1=t1, w2=w2f, t2=t2, w3=w3, b3=b3)


def fiber_optic_fnn(x, params, *, compute_dtype=jnp.bfloat16, tm=256):
    B, input_dim = x.shape
    hidden_dim = params["w1"].shape[1]
    half = params["w2"].shape[1]
    output_dim = params["w3"].shape[1]
    cd = compute_dtype

    # bf16 matmul operands (native MXU path), f32 accumulate / epilogue.
    w1 = params["w1"].astype(cd)
    w2 = params["w2"].astype(cd)
    w3 = params["w3"].astype(cd)
    t1 = params["t1"].reshape(1, hidden_dim).astype(jnp.float32)
    t2 = params["t2"].reshape(1, half).astype(jnp.float32)
    b3 = params["b3"].reshape(1, output_dim).astype(jnp.float32)

    # Batch tiling: weights / shifts stay VMEM-resident (constant index maps);
    # x / output tiles stream and double-buffer.  Cap tm so that whenever the
    # batch allows it there are >= 2 tiles (v7x megacore: both TCs get work);
    # no batch padding -- Pallas clips the last partial block (garbage reads
    # only feed rows whose stores are masked off).
    tm = max(8, min(tm, _round_up(pl.cdiv(B, 2), 8)))
    grid = (pl.cdiv(B, tm),)

    const = lambda shape: pl.BlockSpec(shape, lambda i: (0, 0))

    flops = 2 * B * (input_dim * hidden_dim + hidden_dim * half
                     + half * output_dim)
    bytes_accessed = (x.size * x.dtype.itemsize
                      + w1.size * w1.dtype.itemsize
                      + w2.size * w2.dtype.itemsize
                      + w3.size * w3.dtype.itemsize
                      + (t1.size + t2.size + b3.size) * 4
                      + B * output_dim * 4)

    # NOTE: total resident VMEM is <1 MiB at these dims on every generation.
    # If hidden/input dims ever scale into the thousands, set
    # pipeline_mode=pl.Buffered(1) on the weight specs and an explicit
    # vmem_limit_bytes re-derived against v7x's 64 MiB VMEM.
    out = pl.pallas_call(
        _fnn_kernel,
        out_shape=jax.ShapeDtypeStruct((B, output_dim), jnp.float32),
        grid=grid,
        in_specs=[
            pl.BlockSpec((tm, input_dim), lambda i: (i, 0)),   # streamed
            const((input_dim, hidden_dim)),                    # resident
            const((1, hidden_dim)),
            const((hidden_dim, half)),
            const((1, half)),
            const((half, output_dim)),
            const((1, output_dim)),
        ],
        out_specs=pl.BlockSpec((tm, output_dim), lambda i: (i, 0)),
        compiler_params=pltpu.CompilerParams(
            dimension_semantics=("parallel",)),  # batch tiles shard across TCs
        cost_estimate=pl.CostEstimate(flops=flops, transcendentals=0,
                                      bytes_accessed=bytes_accessed),
    )(x, w1, t1, w2, t2, w3, b3)

    return out


def fiber_optic_fnn_ref(x, params, compute_dtype=jnp.bfloat16):
    """Pure-JAX reference with identical dtype handling (eval-mode forward)."""
    cd = compute_dtype
    h1 = jnp.dot(x.astype(cd), params["w1"].astype(cd),
                 preferred_element_type=jnp.float32) + params["t1"]
    h1 = jnp.maximum(h1, 0.0)
    h2 = jnp.dot(h1.astype(cd), params["w2"].astype(cd),
                 preferred_element_type=jnp.float32) + params["t2"]
    h2 = jnp.maximum(h2, 0.0)
    return (jnp.dot(h2.astype(cd), params["w3"].astype(cd),
                    preferred_element_type=jnp.float32) + params["b3"])


if __name__ == "__main__":
    batch = 8
    input_dim = 16
    hidden_dim = 128
    output_dim = 1

    key = jax.random.PRNGKey(0)
    x = jax.random.normal(key, (batch, input_dim), jnp.float32)
    params = make_params(input_dim, hidden_dim, output_dim, seed=0)

    out = fiber_optic_fnn(x, params)
    out = jax.block_until_ready(out)

    ref = fiber_optic_fnn_ref(x, params)
    assert out.shape == (batch, output_dim), out.shape
    assert jnp.allclose(out, ref, atol=1e-2, rtol=1e-2), "mismatch vs reference"

    print("KERNEL_OK")
</pallas_src>

<mosaic_0001>
module attributes {stable_mosaic.version = 11 : i64} {
  func.func @_fnn_kernel(%arg0: i32, %arg1: memref<8x16xf32, #tpu.memory_space<vmem>>, %arg2: memref<16x128xbf16, #tpu.memory_space<vmem>>, %arg3: memref<1x128xf32, #tpu.memory_space<vmem>>, %arg4: memref<128x64xbf16, #tpu.memory_space<vmem>>, %arg5: memref<1x64xf32, #tpu.memory_space<vmem>>, %arg6: memref<64x1xbf16, #tpu.memory_space<vmem>>, %arg7: memref<1x1xf32, #tpu.memory_space<vmem>>, %arg8: memref<8x1xf32, #tpu.memory_space<vmem>>) attributes {dimension_semantics = [#tpu.dimension_semantics<parallel>], iteration_bounds = array<i64: 1>, scalar_prefetch = 0 : i64, scratch_operands = 0 : i64, tpu.core_type = #tpu.core_type<tc>, window_params = [{transform_indices = @transform_0, window_bounds = array<i64: 8, 16>}, {pipeline_mode = #tpu.pipeline_mode<synchronous>, transform_indices = @transform_1, window_bounds = array<i64: 16, 128>}, {pipeline_mode = #tpu.pipeline_mode<synchronous>, transform_indices = @transform_2, window_bounds = array<i64: 1, 128>}, {pipeline_mode = #tpu.pipeline_mode<synchronous>, transform_indices = @transform_3, window_bounds = array<i64: 128, 64>}, {pipeline_mode = #tpu.pipeline_mode<synchronous>, transform_indices = @transform_4, window_bounds = array<i64: 1, 64>}, {pipeline_mode = #tpu.pipeline_mode<synchronous>, transform_indices = @transform_5, window_bounds = array<i64: 64, 1>}, {pipeline_mode = #tpu.pipeline_mode<synchronous>, transform_indices = @transform_6, window_bounds = array<i64: 1, 1>}, {transform_indices = @transform_7, window_bounds = array<i64: 8, 1>}]} {
    %c0 = arith.constant 0 : index
    %c0_0 = arith.constant 0 : index
    %0 = vector.load %arg1[%c0, %c0_0] : memref<8x16xf32, #tpu.memory_space<vmem>>, vector<8x16xf32>
    %1 = arith.truncf %0 : vector<8x16xf32> to vector<8x16xbf16>
    %c0_1 = arith.constant 0 : index
    %c0_2 = arith.constant 0 : index
    %2 = vector.load %arg2[%c0_1, %c0_2] : memref<16x128xbf16, #tpu.memory_space<vmem>>, vector<16x128xbf16>
    %cst = arith.constant dense<0.000000e+00> : vector<8x128xf32>
    %3 = tpu.matmul %1, %2, %cst {dimension_numbers = #tpu.dot_dimension_numbers<[1], [0], [0], [1], [0, 0, 1, 1], [], []>} : vector<8x16xbf16>, vector<16x128xbf16>, vector<8x128xf32> -> vector<8x128xf32>
    %c0_3 = arith.constant 0 : index
    %c0_4 = arith.constant 0 : index
    %4 = vector.load %arg3[%c0_3, %c0_4] : memref<1x128xf32, #tpu.memory_space<vmem>>, vector<1x128xf32>
    %5 = vector.broadcast %4 : vector<1x128xf32> to vector<8x128xf32>
    %6 = arith.addf %3, %5 : vector<8x128xf32>
    %cst_5 = arith.constant 0.000000e+00 : f32
    %7 = vector.broadcast %cst_5 : f32 to vector<8x128xf32>
    %8 = arith.maximumf %6, %7 : vector<8x128xf32>
    %9 = arith.truncf %8 : vector<8x128xf32> to vector<8x128xbf16>
    %c0_6 = arith.constant 0 : index
    %c0_7 = arith.constant 0 : index
    %10 = vector.load %arg4[%c0_6, %c0_7] : memref<128x64xbf16, #tpu.memory_space<vmem>>, vector<128x64xbf16>
    %cst_8 = arith.constant dense<0.000000e+00> : vector<8x64xf32>
    %11 = tpu.matmul %9, %10, %cst_8 {dimension_numbers = #tpu.dot_dimension_numbers<[1], [0], [0], [1], [0, 0, 1, 1], [], []>} : vector<8x128xbf16>, vector<128x64xbf16>, vector<8x64xf32> -> vector<8x64xf32>
    %c0_9 = arith.constant 0 : index
    %c0_10 = arith.constant 0 : index
    %12 = vector.load %arg5[%c0_9, %c0_10] : memref<1x64xf32, #tpu.memory_space<vmem>>, vector<1x64xf32>
    %13 = vector.broadcast %12 : vector<1x64xf32> to vector<8x64xf32>
    %14 = arith.addf %11, %13 : vector<8x64xf32>
    %cst_11 = arith.constant 0.000000e+00 : f32
    %15 = vector.broadcast %cst_11 : f32 to vector<8x64xf32>
    %16 = arith.maximumf %14, %15 : vector<8x64xf32>
    %17 = arith.truncf %16 : vector<8x64xf32> to vector<8x64xbf16>
    %c0_12 = arith.constant 0 : index
    %c0_13 = arith.constant 0 : index
    %18 = vector.load %arg6[%c0_12, %c0_13] : memref<64x1xbf16, #tpu.memory_space<vmem>>, vector<64x1xbf16>
    %cst_14 = arith.constant dense<0.000000e+00> : vector<8x1xf32>
    %19 = tpu.matmul %17, %18, %cst_14 {dimension_numbers = #tpu.dot_dimension_numbers<[1], [0], [0], [1], [0, 0, 1, 1], [], []>} : vector<8x64xbf16>, vector<64x1xbf16>, vector<8x1xf32> -> vector<8x1xf32>
    %c0_15 = arith.constant 0 : index
    %c0_16 = arith.constant 0 : index
    %20 = vector.load %arg7[%c0_15, %c0_16] : memref<1x1xf32, #tpu.memory_space<vmem>>, vector<1x1xf32>
    %21 = vector.broadcast %20 : vector<1x1xf32> to vector<8x1xf32>
    %22 = arith.addf %19, %21 : vector<8x1xf32>
    %c0_17 = arith.constant 0 : index
    %c0_18 = arith.constant 0 : index
    %23 = vector.load %arg8[%c0_17, %c0_18] : memref<8x1xf32, #tpu.memory_space<vmem>>, vector<8x1xf32>
    tpu.vector_store %arg8[%c0_17, %c0_18], %22 {strides = array<i32>} : memref<8x1xf32, #tpu.memory_space<vmem>>, vector<8x1xf32>,
    return
  }
  func.func @transform_0(%arg0: i32) -> (i32, i32) {
    %c0_i32 = arith.constant 0 : i32
    %c0_i32_0 = arith.constant 0 : i32
    return %arg0, %c0_i32 : i32, i32
  }
  func.func @transform_1(%arg0: i32) -> (i32, i32) {
    %c0_i32 = arith.constant 0 : i32
    %c0_i32_0 = arith.constant 0 : i32
    %c0_i32_1 = arith.constant 0 : i32
    return %c0_i32, %c0_i32_0 : i32, i32
  }
  func.func @transform_2(%arg0: i32) -> (i32, i32) {
    %c0_i32 = arith.constant 0 : i32
    %c0_i32_0 = arith.constant 0 : i32
    %c0_i32_1 = arith.constant 0 : i32
    return %c0_i32, %c0_i32_0 : i32, i32
  }
  func.func @transform_3(%arg0: i32) -> (i32, i32) {
    %c0_i32 = arith.constant 0 : i32
    %c0_i32_0 = arith.constant 0 : i32
    %c0_i32_1 = arith.constant 0 : i32
    return %c0_i32, %c0_i32_0 : i32, i32
  }
  func.func @transform_4(%arg0: i32) -> (i32, i32) {
    %c0_i32 = arith.constant 0 : i32
    %c0_i32_0 = arith.constant 0 : i32
    %c0_i32_1 = arith.constant 0 : i32
    return %c0_i32, %c0_i32_0 : i32, i32
  }
  func.func @transform_5(%arg0: i32) -> (i32, i32) {
    %c0_i32 = arith.constant 0 : i32
    %c0_i32_0 = arith.constant 0 : i32
    %c0_i32_1 = arith.constant 0 : i32
    return %c0_i32, %c0_i32_0 : i32, i32
  }
  func.func @transform_6(%arg0: i32) -> (i32, i32) {
    %c0_i32 = arith.constant 0 : i32
    %c0_i32_0 = arith.constant 0 : i32
    %c0_i32_1 = arith.constant 0 : i32
    return %c0_i32, %c0_i32_0 : i32, i32
  }
  func.func @transform_7(%arg0: i32) -> (i32, i32) {
    %c0_i32 = arith.constant 0 : i32
    %c0_i32_0 = arith.constant 0 : i32
    return %arg0, %c0_i32 : i32, i32
  }
}

</mosaic_0001>

<llo_original>
// kernel: tpu_custom_call.1
$region0: #{tpu_custom_call.1}
  #allocation0 [shape = 'u32[]', space=smem, size = 0x4, offset = 0x4, fixed_abs, tag = 'smem constant byte address 0x4 - core index']
  #allocation1 [shape = 'u32[72,128]{1,0:T(1,128)}', space=vmem, size = 0x9000, scoped, tag = 'internal scratch']
  #allocation2 [shape = 'f32[1,1]{1,0:T(1,128)S(1)}', space=vmem, size = 0x200, scoped, tag = 'scoped memory for tpu_custom_call.1']
  %s0 = inlined_call_operand.vmem [shape: f32[8,16], index: 0, kind: input, shape index: {}]
  %s1 = inlined_call_operand.vmem [shape: bf16[16,128], index: 1, kind: input, shape index: {}]
  %s2 = inlined_call_operand.vmem [shape: f32[1,128], index: 2, kind: input, shape index: {}]
  %s3 = inlined_call_operand.vmem [shape: bf16[128,64], index: 3, kind: input, shape index: {}]
  %s4 = inlined_call_operand.vmem [shape: f32[1,64], index: 4, kind: input, shape index: {}]
  %s5 = inlined_call_operand.vmem [shape: bf16[64,1], index: 5, kind: input, shape index: {}]
  %s6 = inlined_call_operand.<no memory space> [shape: f32[1,1], index: 6, kind: input, shape index: {}]
  %s7 = inlined_call_operand.vmem [shape: f32[8,1], index: 7, kind: output, shape index: {}]
  %s8 = sld [smem:[#allocation0]]
  $region38: #{tpu_custom_call.1} parent=0
    _
  %s10 = ssub.s32 1, %s8
  %s11 = scalar_select 0, %s10, %s8
  %v12 = vstv %s6
  %13 = vst [vmem:[#allocation2] sm:$0x1] %v12
  // Predicated region
  $region2: #{tpu_custom_call.1} parent=0 // pred_check
    _
  $region3: #{tpu_custom_call.1} parent=0 // pred_check_branch
    %15 = sbr.rel (0) target = $region5
  $region4: #{tpu_custom_call.1} parent=0 // pred_region
    _
  $region5: #{tpu_custom_call.1} parent=0 // pred_fallthru
    _
  // Predicated region
  $region6: #{tpu_custom_call.1} parent=0 // pred_check
    _
  $region7: #{tpu_custom_call.1} parent=0 // pred_check_branch
    %17 = sbr.rel (0) target = $region9
  $region8: #{tpu_custom_call.1} parent=0 // pred_region
    _
  $region9: #{tpu_custom_call.1} parent=0 // pred_fallthru
    _
  // Predicated region
  $region10: #{tpu_custom_call.1} parent=0 // pred_check
    _
  $region11: #{tpu_custom_call.1} parent=0 // pred_check_branch
    %19 = sbr.rel (0) target = $region13
  $region12: #{tpu_custom_call.1} parent=0 // pred_region
    _
  $region13: #{tpu_custom_call.1} parent=0 // pred_fallthru
    _
  // Predicated region
  $region14: #{tpu_custom_call.1} parent=0 // pred_check
    _
  $region15: #{tpu_custom_call.1} parent=0 // pred_check_branch
    %21 = sbr.rel (0) target = $region17
  $region16: #{tpu_custom_call.1} parent=0 // pred_region
    _
  $region17: #{tpu_custom_call.1} parent=0 // pred_fallthru
    _
  // Predicated region
  $region18: #{tpu_custom_call.1} parent=0 // pred_check
    _
  $region19: #{tpu_custom_call.1} parent=0 // pred_check_branch
    %23 = sbr.rel (0) target = $region21
  $region20: #{tpu_custom_call.1} parent=0 // pred_region
    _
  $region21: #{tpu_custom_call.1} parent=0 // pred_fallthru
    _
  // Predicated region
  $region22: #{tpu_custom_call.1} parent=0 // pred_check
    _
  $region23: #{tpu_custom_call.1} parent=0 // pred_check_branch
    %25 = sbr.rel (0) target = $region25
  $region24: #{tpu_custom_call.1} parent=0 // pred_region
    _
  $region25: #{tpu_custom_call.1} parent=0 // pred_fallthru
    _
  // Predicated region
  $region26: #{tpu_custom_call.1} parent=0 // pred_check
    _
  $region27: #{tpu_custom_call.1} parent=0 // pred_check_branch
    %27 = sbr.rel (0) target = $region29
  $region28: #{tpu_custom_call.1} parent=0 // pred_region
    _
  $region29: #{tpu_custom_call.1} parent=0 // pred_fallthru
    _
  %v29 = vld [vmem:[%s0] sm:$0xff]
  %v30 = vpack.c.bf16 %v29, %v29
  %v31 = vld [vmem:[%s1] sm:$0xf]
  %v32 = vld [vmem:[%s1 + $0x4] sm:$0xf]
  %v33 = vld [vmem:[%s2] sm:$0x1]
  %v35 = vperm.slane %v33, 0
  %v39 = vunpack.c.l.b16 %v31
  %v40 = vunpack.c.l.b16 %v32
  %v41 = vpack.c.b16 %v40, %v39
  %vm43 = vcmask 130048
  %v45 = vsel %vm43, %v30, 0
  %47 = vmatpush.bf16.msra.mxu0 0
  %48 = vmatpush.bf16.msra.mxu0 0
  %49 = vmatpush.bf16.msra.mxu0 0
  %50 = vmatpush.bf16.msra.mxu0 0
  %51 = vmatpush.bf16.msra.mxu0 0
  %52 = vmatpush.bf16.msra.mxu0 0
  %53 = vmatpush.bf16.msra.mxu0 0
  %54 = vmatpush.bf16.msra.mxu0 %v41
  %55 = vmatmul.bf16.gmra.mxu0 %v45
  %v56 = vpop.f32.mrf.mxu0
  %v57 = vadd.f32 %v35, %v56
  %v58 = vpop.f32.mrf.mxu0
  %59 = vdwg.mxu0
  %v60 = vmax.f32 %v57, 0.0
  %v61 = vpack.c.bf16 %v60, %v60
  %v62 = vld [vmem:[%s3] sm:$0xf]
  %v63 = vld [vmem:[%s3 + $0x4] sm:$0xf]
  %v64 = vld [vmem:[%s3 + $0x8] sm:$0xf]
  %v65 = vld [vmem:[%s3 + $0xc] sm:$0xf]
  %v66 = vld [vmem:[%s3 + $0x10] sm:$0xf]
  %v67 = vld [vmem:[%s3 + $0x14] sm:$0xf]
  %v68 = vld [vmem:[%s3 + $0x18] sm:$0xf]
  %v69 = vld [vmem:[%s3 + $0x1c] sm:$0xf]
  %v70 = vld [vmem:[%s3 + $0x20] sm:$0xf]
  %v71 = vld [vmem:[%s3 + $0x24] sm:$0xf]
  %v72 = vld [vmem:[%s3 + $0x28] sm:$0xf]
  %v73 = vld [vmem:[%s3 + $0x2c] sm:$0xf]
  %v74 = vld [vmem:[%s3 + $0x30] sm:$0xf]
  %v75 = vld [vmem:[%s3 + $0x34] sm:$0xf]
  %v76 = vld [vmem:[%s3 + $0x38] sm:$0xf]
  %v77 = vld [vmem:[%s3 + $0x3c] sm:$0xf]
  %v78 = vld [vmem:[%s4] sm:$0x1]
  %v80 = vperm.slane %v78, 0
  %v98 = vunpack.c.l.b16 %v62
  %v99 = vunpack.c.l.b16 %v63
  %v100 = vunpack.c.l.b16 %v64
  %v101 = vunpack.c.l.b16 %v65
  %v102 = vunpack.c.l.b16 %v66
  %v103 = vunpack.c.l.b16 %v67
  %v104 = vunpack.c.l.b16 %v68
  %v105 = vunpack.c.l.b16 %v69
  %v106 = vunpack.c.l.b16 %v70
  %v107 = vunpack.c.l.b16 %v71
  %v108 = vunpack.c.l.b16 %v72
  %v109 = vunpack.c.l.b16 %v73
  %v110 = vunpack.c.l.b16 %v74
  %v111 = vunpack.c.l.b16 %v75
  %v112 = vunpack.c.l.b16 %v76
  %v113 = vunpack.c.l.b16 %v77
  %v114 = vpack.c.b16 %v99, %v98
  %v115 = vpack.c.b16 %v101, %v100
  %v116 = vpack.c.b16 %v103, %v102
  %v117 = vpack.c.b16 %v105, %v104
  %v118 = vpack.c.b16 %v107, %v106
  %v119 = vpack.c.b16 %v109, %v108
  %v120 = vpack.c.b16 %v111, %v110
  %v121 = vpack.c.b16 %v113, %v112
  %130 = vmatpush.bf16.msra.mxu0 %v121
  %131 = vmatpush.bf16.msra.mxu0 %v120
  %132 = vmatpush.bf16.msra.mxu0 %v119
  %133 = vmatpush.bf16.msra.mxu0 %v118
  %134 = vmatpush.bf16.msra.mxu0 %v117
  %135 = vmatpush.bf16.msra.mxu0 %v116
  %136 = vmatpush.bf16.msra.mxu0 %v115
  %137 = vmatpush.bf16.msra.mxu0 %v114
  %138 = vmatmul.bf16.gmra.mxu0 %v61
  %v139 = vpop.f32.mrf.mxu0
  %v140 = vadd.f32 %v80, %v139
  %v141 = vpop.f32.mrf.mxu0
  %142 = vdwg.mxu0
  %v143 = vmax.f32 %v140, 0.0
  %v144 = vpack.c.bf16 %v143, %v143
  %v145 = vld [vmem:[%s5] sm:$0xf]
  %v146 = vld [vmem:[%s5 + $0x4] sm:$0xf]
  %v147 = vld [vmem:[%s5 + $0x8] sm:$0xf]
  %v148 = vld [vmem:[%s5 + $0xc] sm:$0xf]
  %v149 = vld [vmem:[%s5 + $0x10] sm:$0xf]
  %v150 = vld [vmem:[%s5 + $0x14] sm:$0xf]
  %v151 = vld [vmem:[%s5 + $0x18] sm:$0xf]
  %v152 = vld [vmem:[%s5 + $0x1c] sm:$0xf]
  %v153 = vld [vmem:[#allocation2] sm:$0x1]
  %v155 = vperm.slane %v153, 0
  %v165 = vunpack.c.l.b16 %v145
  %v166 = vunpack.c.l.b16 %v146
  %v167 = vunpack.c.l.b16 %v147
  %v168 = vunpack.c.l.b16 %v148
  %v169 = vunpack.c.l.b16 %v149
  %v170 = vunpack.c.l.b16 %v150
  %v171 = vunpack.c.l.b16 %v151
  %v172 = vunpack.c.l.b16 %v152
  %v173 = vpack.c.b16 %v166, %v165
  %v174 = vpack.c.b16 %v168, %v167
  %v175 = vpack.c.b16 %v170, %v169
  %v176 = vpack.c.b16 %v172, %v171
  %vm181 = vcmask 523264
  %v183 = vsel %vm181, %v144, 0
  %185 = vmatpush.bf16.msra.mxu0 0
  %186 = vmatpush.bf16.msra.mxu0 0
  %187 = vmatpush.bf16.msra.mxu0 0
  %188 = vmatpush.bf16.msra.mxu0 0
  %189 = vmatpush.bf16.msra.mxu0 %v176
  %190 = vmatpush.bf16.msra.mxu0 %v175
  %191 = vmatpush.bf16.msra.mxu0 %v174
  %192 = vmatpush.bf16.msra.mxu0 %v173
  %193 = vmatmul.bf16.gmra.mxu0 %v183
  %v194 = vpop.f32.mrf.mxu0
  %v195 = vadd.f32 %v155, %v194
  %v196 = vpop.f32.mrf.mxu0
  %197 = vdwg.mxu0
  %vm198 = vcmask 7168
  %199 = vst.msk [vmem:[%s7] sm:$0xff] %vm198, %v195
  // Predicated region
  $region30: #{tpu_custom_call.1} parent=0 // pred_check
    _
  $region31: #{tpu_custom_call.1} parent=0 // pred_check_branch
    %201 = sbr.rel (0) target = $region33
  $region32: #{tpu_custom_call.1} parent=0 // pred_region
    _
  $region33: #{tpu_custom_call.1} parent=0 // pred_fallthru
    _
  // Predicated region
  $region34: #{tpu_custom_call.1} parent=0 // pred_check
    _
  $region35: #{tpu_custom_call.1} parent=0 // pred_check_branch
    %203 = sbr.rel (0) target = $region37
  $region36: #{tpu_custom_call.1} parent=0 // pred_region
    _
  $region37: #{tpu_custom_call.1} parent=0 // pred_fallthru
    _

</llo_original>
